<compile_context>
chip_gen: v6e
topology: v6e:2x2x1
jax: 0.10.0
libtpu: 0.0.40
codegen_flags: <defaults>
</compile_context>

<pallas_src>
import functools

import numpy as np
import jax
import jax.numpy as jnp
from jax.experimental import pallas as pl
from jax.experimental.pallas import tpu as pltpu


# ----------------------------- small helpers ------------------------------- #

def _cdiv(a: int, b: int) -> int:
    return -(-a // b)


def _round_up(v: int, m: int) -> int:
    return _cdiv(v, m) * m


def _sublane_min(dtype) -> int:
    # f32 -> 8, bf16 -> 16, int8/fp8 -> 32 (vreg sublane packing granularity).
    return max(8, 32 // np.dtype(dtype).itemsize)


def _pick_tile(total_p: int, cap: int) -> int:
    """Largest multiple of 128 <= cap that evenly divides total_p (mult of 128)."""
    best = 128
    t = 128
    limit = min(cap, total_p)
    while t <= limit:
        if total_p % t == 0:
            best = t
        t += 128
    return best


# ------------------------------- kernels ----------------------------------- #

def _cls_fc_kernel_f32_out(x_ref, w_ref, b_ref, o_ref):
    """f32 output: accumulate directly into the K-resident output block."""
    k = pl.program_id(2)

    @pl.when(k == 0)
    def _init():
        o_ref[...] = jnp.zeros_like(o_ref)

    o_ref[...] += jnp.dot(x_ref[...], w_ref[...],
                          preferred_element_type=jnp.float32)

    @pl.when(k == pl.num_programs(2) - 1)
    def _epilogue():
        o_ref[...] = o_ref[...] + b_ref[...].astype(jnp.float32)


def _cls_fc_kernel_acc(x_ref, w_ref, b_ref, o_ref, acc_ref):
    """Non-f32 output: f32 VMEM accumulator, cast in the last-K epilogue."""
    k = pl.program_id(2)

    @pl.when(k == 0)
    def _init():
        acc_ref[...] = jnp.zeros_like(acc_ref)

    acc_ref[...] += jnp.dot(x_ref[...], w_ref[...],
                            preferred_element_type=jnp.float32)

    @pl.when(k == pl.num_programs(2) - 1)
    def _epilogue():
        o_ref[...] = (acc_ref[...] + b_ref[...].astype(jnp.float32)
                      ).astype(o_ref.dtype)


# --------------------------- parameter prep -------------------------------- #

def prepare_cls_fc_params(weight, bias, *, batch_hint=None, tn=512, tk=1024,
                          tm_cap=512, matmul_dtype=None):
    """Transpose / pad / (optionally) cast the nn.Linear parameters once.

    Args:
      weight: [num_cls, in_dim]  (torch.nn.Linear layout, NOT transposed)
      bias:   [num_cls]
      batch_hint: expected (flattened) batch size; used only to keep >=2
        parallel blocks on the class axis when the batch grid is 1 (v7x).
      matmul_dtype: e.g. jnp.bfloat16 to halve weight HBM bytes and run the
        MXU at its fast rate; None keeps the original dtype (exact numerics).

    Returns:
      (w_t, b, cfg): padded transposed weight [k_p, cls_p], padded f32 bias
      [1, cls_p], and a dict of static config kwargs for `cls_fc_apply`.
    """
    num_cls, in_dim = weight.shape

    cls_p = _round_up(num_cls, 128)
    k_p = _round_up(in_dim, 128)

    tn = _pick_tile(cls_p, tn)
    tk = _pick_tile(k_p, tk)

    # v7x megacore: with a single batch block and a single class block, one of
    # the two TensorCores would idle; split the class axis into >=2 blocks.
    if batch_hint is not None:
        m_blocks = _cdiv(max(int(batch_hint), 1), tm_cap)
        if m_blocks <= 1 and cls_p // tn <= 1 and cls_p >= 256:
            tn = _pick_tile(cls_p, cls_p // 2)

    # Transpose ONCE (no in-kernel weight transpose), pad only if needed, cast.
    w_t = weight.T                                   # [in_dim, num_cls]
    if (k_p - in_dim) or (cls_p - num_cls):
        w_t = jnp.pad(w_t, ((0, k_p - in_dim), (0, cls_p - num_cls)))
    if matmul_dtype is not None and w_t.dtype != matmul_dtype:
        w_t = w_t.astype(matmul_dtype)

    b = bias.astype(jnp.float32).reshape(1, num_cls)
    if cls_p - num_cls:
        b = jnp.pad(b, ((0, 0), (0, cls_p - num_cls)))

    cfg = dict(num_cls=num_cls, in_dim=in_dim, tn=tn, tk=tk, tm_cap=tm_cap,
               matmul_dtype=matmul_dtype)
    return w_t, b, cfg


# ------------------------------ forward ------------------------------------ #

def cls_fc_apply(x, w_t, b, *, num_cls, in_dim, tn, tk, tm_cap=512,
                 matmul_dtype=None, vmem_limit_bytes=48 * 1024 * 1024):
    """Apply the classifier head using pre-prepared (transposed/padded) params."""
    *lead, in_dim_x = x.shape
    assert in_dim_x == in_dim, (in_dim_x, in_dim)
    k_p, cls_p = w_t.shape
    assert cls_p % tn == 0 and k_p % tk == 0, (cls_p, tn, k_p, tk)

    out_dtype = x.dtype
    x2d = x.reshape(-1, in_dim)
    n = x2d.shape[0]

    # Tile the batch: one M block for n <= tm_cap (single pass over the weight).
    op_dtype = matmul_dtype if matmul_dtype is not None else x2d.dtype
    sub_min = _sublane_min(op_dtype)
    n_eff = max(n, 1)
    m_blocks = _cdiv(n_eff, tm_cap)
    tm = _round_up(_cdiv(n_eff, m_blocks), sub_min)
    n_p = tm * m_blocks

    # Pad activations (guarded: no-op copy when already aligned) and cast.
    pad_rows, pad_k = n_p - n, k_p - in_dim
    if pad_rows or pad_k:
        x2d = jnp.pad(x2d, ((0, pad_rows), (0, pad_k)))
    if matmul_dtype is not None and x2d.dtype != matmul_dtype:
        x2d = x2d.astype(matmul_dtype)

    grid = (n_p // tm, cls_p // tn, k_p // tk)

    # f32 output -> accumulate directly in the K-resident output block.
    f32_out = (out_dtype == jnp.float32)
    kernel = _cls_fc_kernel_f32_out if f32_out else _cls_fc_kernel_acc
    scratch = [] if f32_out else [pltpu.VMEM((tm, tn), jnp.float32)]

    cost = pl.CostEstimate(
        flops=2 * n_p * k_p * cls_p,
        transcendentals=0,
        bytes_accessed=(
            x2d.size * x2d.dtype.itemsize * (cls_p // tn)      # x re-read per N tile
            + w_t.size * w_t.dtype.itemsize * (n_p // tm)      # weight re-read per M tile
            + b.size * b.dtype.itemsize
            + n_p * cls_p * np.dtype(out_dtype).itemsize
        ),
    )

    out_p = pl.pallas_call(
        kernel,
        out_shape=jax.ShapeDtypeStruct((n_p, cls_p), out_dtype),
        grid_spec=pltpu.PrefetchScalarGridSpec(
            num_scalar_prefetch=0,
            grid=grid,
            in_specs=[
                pl.BlockSpec((tm, tk), lambda i, j, k: (i, k)),   # x
                pl.BlockSpec((tk, tn), lambda i, j, k: (k, j)),   # weight.T (pre-transposed)
                pl.BlockSpec((1, tn), lambda i, j, k: (0, j)),    # bias
            ],
            out_specs=pl.BlockSpec((tm, tn), lambda i, j, k: (i, j)),
            scratch_shapes=scratch,
        ),
        compiler_params=pltpu.CompilerParams(
            dimension_semantics=("parallel", "parallel", "arbitrary"),
            vmem_limit_bytes=vmem_limit_bytes,
        ),
        cost_estimate=cost,
    )(x2d, w_t, b)

    out = out_p
    if n_p != n or cls_p != num_cls:
        out = out[:n, :num_cls]
    return out.reshape(*lead, num_cls)


def cls_fc_forward(x, weight, bias, *, tm=512, tn=512, tk=1024,
                   matmul_dtype=None):
    """Pallas equivalent of ClsFC.forward (nn.Linear).

    Convenience entry point: for hot inference loops, call
    `prepare_cls_fc_params` once at init and reuse `cls_fc_apply`.

    Args:
      x:      [..., in_dim]
      weight: [num_cls, in_dim]   (torch.nn.Linear layout)
      bias:   [num_cls]
    Returns:
      [..., num_cls]
    """
    n = 1
    for d in x.shape[:-1]:
        n *= d
    w_t, b, cfg = prepare_cls_fc_params(
        weight, bias, batch_hint=n, tn=tn, tk=tk, tm_cap=tm,
        matmul_dtype=matmul_dtype)
    return cls_fc_apply(x, w_t, b, **cfg)


# -------------------------------- demo -------------------------------------- #

if __name__ == "__main__":
    # Small shapes consistent with the module: batch=8, in_dim=32, num_cls=16.
    N, IN_DIM, NUM_CLS = 8, 32, 16

    key = jax.random.PRNGKey(0)
    kx, kw, kb = jax.random.split(key, 3)

    x = jax.random.normal(kx, (N, IN_DIM), dtype=jnp.float32)
    bound = 1.0 / (IN_DIM ** 0.5)
    weight = jax.random.uniform(
        kw, (NUM_CLS, IN_DIM), minval=-bound, maxval=bound, dtype=jnp.float32)
    bias = jax.random.uniform(
        kb, (NUM_CLS,), minval=-bound, maxval=bound, dtype=jnp.float32)

    ref = x @ weight.T + bias

    # 1) Exact f32 path (matches nn.Linear numerics).
    fwd = jax.jit(cls_fc_forward)
    out = fwd(x, weight, bias)
    jax.block_until_ready(out)
    assert out.shape == (N, NUM_CLS)
    assert jnp.allclose(out, ref, atol=1e-5, rtol=1e-5), (
        float(jnp.max(jnp.abs(out - ref))))

    # 2) bf16-MXU path, with params prepared ONCE outside the jitted apply
    #    (halved weight HBM traffic; f32 accumulation).
    w_t_bf16, b_p, cfg = prepare_cls_fc_params(
        weight, bias, batch_hint=N, matmul_dtype=jnp.bfloat16)
    apply_fn = jax.jit(functools.partial(cls_fc_apply, **cfg))
    out_bf16 = apply_fn(x, w_t_bf16, b_p)
    jax.block_until_ready(out_bf16)
    assert out_bf16.shape == (N, NUM_CLS)
    assert jnp.allclose(out_bf16, ref, atol=5e-2, rtol=5e-2), (
        float(jnp.max(jnp.abs(out_bf16 - ref))))

    print("KERNEL_OK")
</pallas_src>

<mosaic_0001>
module attributes {stable_mosaic.version = 11 : i64} {
  func.func @_cls_fc_kernel_f32_out(%arg0: i32, %arg1: i32, %arg2: i32, %arg3: memref<8x128xf32, #tpu.memory_space<vmem>>, %arg4: memref<128x128xf32, #tpu.memory_space<vmem>>, %arg5: memref<1x128xf32, #tpu.memory_space<vmem>>, %arg6: memref<8x128xf32, #tpu.memory_space<vmem>>) attributes {dimension_semantics = [#tpu.dimension_semantics<parallel>, #tpu.dimension_semantics<parallel>, #tpu.dimension_semantics<arbitrary>], iteration_bounds = array<i64: 1, 1, 1>, scalar_prefetch = 0 : i64, scratch_operands = 0 : i64, tpu.core_type = #tpu.core_type<tc>, window_params = [{transform_indices = @transform_0, window_bounds = array<i64: 8, 128>}, {transform_indices = @transform_1, window_bounds = array<i64: 128, 128>}, {transform_indices = @transform_2, window_bounds = array<i64: 1, 128>}, {transform_indices = @transform_3, window_bounds = array<i64: 8, 128>}]} {
    %c0_i32 = arith.constant 0 : i32
    %0 = arith.cmpi eq, %arg2, %c0_i32 : i32
    %1 = arith.extui %0 : i1 to i32
    %c0_i32_0 = arith.constant 0 : i32
    %2 = arith.cmpi ne, %1, %c0_i32_0 : i32
    scf.if %2 {
      %cst_10 = arith.constant 0.000000e+00 : f32
      %12 = vector.broadcast %cst_10 : f32 to vector<8x128xf32>
      %c0_11 = arith.constant 0 : index
      %c0_12 = arith.constant 0 : index
      %13 = vector.load %arg6[%c0_11, %c0_12] : memref<8x128xf32, #tpu.memory_space<vmem>>, vector<8x128xf32>
      tpu.vector_store %arg6[%c0_11, %c0_12], %12 {strides = array<i32>} : memref<8x128xf32, #tpu.memory_space<vmem>>, vector<8x128xf32>,
    } else {
    }
    %c0 = arith.constant 0 : index
    %c0_1 = arith.constant 0 : index
    %3 = vector.load %arg6[%c0, %c0_1] : memref<8x128xf32, #tpu.memory_space<vmem>>, vector<8x128xf32>
    %c0_2 = arith.constant 0 : index
    %c0_3 = arith.constant 0 : index
    %4 = vector.load %arg3[%c0_2, %c0_3] : memref<8x128xf32, #tpu.memory_space<vmem>>, vector<8x128xf32>
    %c0_4 = arith.constant 0 : index
    %c0_5 = arith.constant 0 : index
    %5 = vector.load %arg4[%c0_4, %c0_5] : memref<128x128xf32, #tpu.memory_space<vmem>>, vector<128x128xf32>
    %cst = arith.constant dense<0.000000e+00> : vector<8x128xf32>
    %6 = tpu.matmul %4, %5, %cst {dimension_numbers = #tpu.dot_dimension_numbers<[1], [0], [0], [1], [0, 0, 1, 1], [], []>} : vector<8x128xf32>, vector<128x128xf32>, vector<8x128xf32> -> vector<8x128xf32>
    %7 = arith.addf %3, %6 : vector<8x128xf32>
    %c0_6 = arith.constant 0 : index
    %c0_7 = arith.constant 0 : index
    %8 = vector.load %arg6[%c0_6, %c0_7] : memref<8x128xf32, #tpu.memory_space<vmem>>, vector<8x128xf32>
    tpu.vector_store %arg6[%c0_6, %c0_7], %7 {strides = array<i32>} : memref<8x128xf32, #tpu.memory_space<vmem>>, vector<8x128xf32>,
    %c0_i32_8 = arith.constant 0 : i32
    %9 = arith.cmpi eq, %arg2, %c0_i32_8 : i32
    %10 = arith.extui %9 : i1 to i32
    %c0_i32_9 = arith.constant 0 : i32
    %11 = arith.cmpi ne, %10, %c0_i32_9 : i32
    scf.if %11 {
      %c0_10 = arith.constant 0 : index
      %c0_11 = arith.constant 0 : index
      %12 = vector.load %arg6[%c0_10, %c0_11] : memref<8x128xf32, #tpu.memory_space<vmem>>, vector<8x128xf32>
      %c0_12 = arith.constant 0 : index
      %c0_13 = arith.constant 0 : index
      %13 = vector.load %arg5[%c0_12, %c0_13] : memref<1x128xf32, #tpu.memory_space<vmem>>, vector<1x128xf32>
      %14 = vector.broadcast %13 : vector<1x128xf32> to vector<8x128xf32>
      %15 = arith.addf %12, %14 : vector<8x128xf32>
      %c0_14 = arith.constant 0 : index
      %c0_15 = arith.constant 0 : index
      %16 = vector.load %arg6[%c0_14, %c0_15] : memref<8x128xf32, #tpu.memory_space<vmem>>, vector<8x128xf32>
      tpu.vector_store %arg6[%c0_14, %c0_15], %15 {strides = array<i32>} : memref<8x128xf32, #tpu.memory_space<vmem>>, vector<8x128xf32>,
    } else {
    }
    return
  }
  func.func @transform_0(%arg0: i32, %arg1: i32, %arg2: i32) -> (i32, i32) {
    %c0_i32 = arith.constant 0 : i32
    return %arg0, %arg2 : i32, i32
  }
  func.func @transform_1(%arg0: i32, %arg1: i32, %arg2: i32) -> (i32, i32) {
    %c0_i32 = arith.constant 0 : i32
    return %arg2, %arg1 : i32, i32
  }
  func.func @transform_2(%arg0: i32, %arg1: i32, %arg2: i32) -> (i32, i32) {
    %c0_i32 = arith.constant 0 : i32
    %c0_i32_0 = arith.constant 0 : i32
    return %c0_i32, %arg1 : i32, i32
  }
  func.func @transform_3(%arg0: i32, %arg1: i32, %arg2: i32) -> (i32, i32) {
    %c0_i32 = arith.constant 0 : i32
    return %arg0, %arg1 : i32, i32
  }
}

</mosaic_0001>

<llo_original>
// kernel: cls_fc_forward.1
$region0: #{cls_fc_forward.1}
  #allocation0 [shape = 'u32[]', space=smem, size = 0x4, offset = 0x4, fixed_abs, tag = 'smem constant byte address 0x4 - core index']
  #allocation1 [shape = 'u32[144,128]{1,0:T(1,128)}', space=vmem, size = 0x12000, scoped, tag = 'internal scratch']
  %s0 = inlined_call_operand.vmem [shape: f32[8,128], index: 0, kind: input, shape index: {}]
  %s1 = inlined_call_operand.vmem [shape: f32[128,128], index: 1, kind: input, shape index: {}]
  %s2 = inlined_call_operand.vmem [shape: f32[1,128], index: 2, kind: input, shape index: {}]
  %s3 = inlined_call_operand.hbm [shape: f32[8,128], index: 3, kind: output, shape index: {}]
  %s4 = sld [smem:[#allocation0]]
  $region30: #{cls_fc_forward.1} parent=0
    _
  %s6 = ssub.s32 1, %s4
  %s7 = scalar_select 0, %s6, %s4
  $region1: #{cls_fc_forward.1} parent=0
    #allocation2 [shape = 'u8[4096]{0}', space=vmem, size = 0x1000, scoped, tag = 'output window, operand 0, single buffered']
    #allocation3 [shape = 's32[1]{0}', space=sflag, size = 0x4, scoped, tag = 'scoped memory for cls_fc_forward.1']
    %8 = vsyncpa [#allocation3], 0
    // Predicated region
    $region2: #{cls_fc_forward.1} parent=1 // pred_check
      _
    $region3: #{cls_fc_forward.1} parent=1 // pred_check_branch
      %10 = sbr.rel (0) target = $region5
    $region4: #{cls_fc_forward.1} parent=1 // pred_region
      _
    $region5: #{cls_fc_forward.1} parent=1 // pred_fallthru
      _
    // Predicated region
    $region6: #{cls_fc_forward.1} parent=1 // pred_check
      _
    $region7: #{cls_fc_forward.1} parent=1 // pred_check_branch
      %12 = sbr.rel (0) target = $region9
    $region8: #{cls_fc_forward.1} parent=1 // pred_region
      _
    $region9: #{cls_fc_forward.1} parent=1 // pred_fallthru
      _
    // Predicated region
    $region10: #{cls_fc_forward.1} parent=1 // pred_check
      _
    $region11: #{cls_fc_forward.1} parent=1 // pred_check_branch
      %14 = sbr.rel (0) target = $region13
    $region12: #{cls_fc_forward.1} parent=1 // pred_region
      _
    $region13: #{cls_fc_forward.1} parent=1 // pred_fallthru
      _
    %p15 = scmp.eq.s32.totalorder 0, 0
    // Predicated region
    $region14: #{cls_fc_forward.1} parent=1 // pred_check
      %p16 = pneg %p15
    $region15: #{cls_fc_forward.1} parent=1 // pred_check_branch
      %18 = sbr.rel (%p16) target = $region17
    $region16: #{cls_fc_forward.1} parent=1 // pred_region
      %19 = vst [vmem:[#allocation2] sm:$0xff] 0.0
    $region17: #{cls_fc_forward.1} parent=1 // pred_fallthru
      _
    %v20 = vld [vmem:[#allocation2] sm:$0xff]
    %v21 = vld [vmem:[%s0] sm:$0xff]
    %v22 = vld [vmem:[%s1] sm:$0xff]
    %v23 = vld [vmem:[%s1 + $0x8] sm:$0xff]
    %v24 = vld [vmem:[%s1 + $0x10] sm:$0xff]
    %v25 = vld [vmem:[%s1 + $0x18] sm:$0xff]
    %v26 = vld [vmem:[%s1 + $0x20] sm:$0xff]
    %v27 = vld [vmem:[%s1 + $0x28] sm:$0xff]
    %v28 = vld [vmem:[%s1 + $0x30] sm:$0xff]
    %v29 = vld [vmem:[%s1 + $0x38] sm:$0xff]
    %v30 = vld [vmem:[%s1 + $0x40] sm:$0xff]
    %v31 = vld [vmem:[%s1 + $0x48] sm:$0xff]
    %v32 = vld [vmem:[%s1 + $0x50] sm:$0xff]
    %v33 = vld [vmem:[%s1 + $0x58] sm:$0xff]
    %v34 = vld [vmem:[%s1 + $0x60] sm:$0xff]
    %v35 = vld [vmem:[%s1 + $0x68] sm:$0xff]
    %v36 = vld [vmem:[%s1 + $0x70] sm:$0xff]
    %v37 = vld [vmem:[%s1 + $0x78] sm:$0xff]
    %38 = vmatprep.subr.mxu0 0.0
    %39 = vmatpush1.msra.mxu0 %v37
    %40 = vmatprep.subr.mxu0 0.0
    %41 = vmatpush1.msra.mxu0 %v36
    %42 = vmatprep.subr.mxu0 0.0
    %43 = vmatpush1.msra.mxu0 %v35
    %44 = vmatprep.subr.mxu0 0.0
    %45 = vmatpush1.msra.mxu0 %v34
    %46 = vmatprep.subr.mxu0 0.0
    %47 = vmatpush1.msra.mxu0 %v33
    %48 = vmatprep.subr.mxu0 0.0
    %49 = vmatpush1.msra.mxu0 %v32
    %50 = vmatprep.subr.mxu0 0.0
    %51 = vmatpush1.msra.mxu0 %v31
    %52 = vmatprep.subr.mxu0 0.0
    %53 = vmatpush1.msra.mxu0 %v30
    %54 = vmatprep.subr.mxu0 0.0
    %55 = vmatpush1.msra.mxu0 %v29
    %56 = vmatprep.subr.mxu0 0.0
    %57 = vmatpush1.msra.mxu0 %v28
    %58 = vmatprep.subr.mxu0 0.0
    %59 = vmatpush1.msra.mxu0 %v27
    %60 = vmatprep.subr.mxu0 0.0
    %61 = vmatpush1.msra.mxu0 %v26
    %62 = vmatprep.subr.mxu0 0.0
    %63 = vmatpush1.msra.mxu0 %v25
    %64 = vmatprep.subr.mxu0 0.0
    %65 = vmatpush1.msra.mxu0 %v24
    %66 = vmatprep.subr.mxu0 0.0
    %67 = vmatpush1.msra.mxu0 %v23
    %68 = vmatprep.subr.mxu0 0.0
    %69 = vmatpush1.msra.mxu0 %v22
    %70 = vmatprep.subr.mxu0 0.0
    %71 = vmatpush2.msra.mxu0 0.0
    %72 = vmatprep.subr.mxu0 0.0
    %73 = vmatpush2.msra.mxu0 0.0
    %74 = vmatprep.subr.mxu0 0.0
    %75 = vmatpush2.msra.mxu0 0.0
    %76 = vmatprep.subr.mxu0 0.0
    %77 = vmatpush2.msra.mxu0 0.0
    %78 = vmatprep.subr.mxu0 0.0
    %79 = vmatpush2.msra.mxu0 0.0
    %80 = vmatprep.subr.mxu0 0.0
    %81 = vmatpush2.msra.mxu0 0.0
    %82 = vmatprep.subr.mxu0 0.0
    %83 = vmatpush2.msra.mxu0 0.0
    %84 = vmatprep.subr.mxu0 0.0
    %85 = vmatpush2.msra.mxu0 0.0
    %86 = vmatprep.subr.mxu0 0.0
    %87 = vmatpush2.msra.mxu0 0.0
    %88 = vmatprep.subr.mxu0 0.0
    %89 = vmatpush2.msra.mxu0 0.0
    %90 = vmatprep.subr.mxu0 0.0
    %91 = vmatpush2.msra.mxu0 0.0
    %92 = vmatprep.subr.mxu0 0.0
    %93 = vmatpush2.msra.mxu0 0.0
    %94 = vmatprep.subr.mxu0 0.0
    %95 = vmatpush2.msra.mxu0 0.0
    %96 = vmatprep.subr.mxu0 0.0
    %97 = vmatpush2.msra.mxu0 0.0
    %98 = vmatprep.subr.mxu0 0.0
    %99 = vmatpush2.msra.mxu0 0.0
    %100 = vmatprep.subr.mxu0 0.0
    %101 = vmatpush2.msra.mxu0 0.0
    %102 = vmatprep.mubr.f32.mxu0 0.0
    %103 = vmatmul.mubr.f32.gmra.mxu0 %v21
    %v104 = vpop.f32.mrf.mxu0
    %v105 = vadd.f32 0.0, %v104
    %v106 = vpop.f32.mrf.mxu0
    %107 = vdwg.mxu0
    %v108 = vadd.f32 %v20, %v105
    %109 = vst [vmem:[#allocation2] sm:$0xff] %v108
    // Predicated region
    $region18: #{cls_fc_forward.1} parent=1 // pred_check
      %p110 = pneg %p15
    $region19: #{cls_fc_forward.1} parent=1 // pred_check_branch
      %112 = sbr.rel (%p110) target = $region21
    $region20: #{cls_fc_forward.1} parent=1 // pred_region
      %v113 = vld [vmem:[#allocation2] sm:$0xff]
      %v114 = vld [vmem:[%s2] sm:$0x1]
      %v116 = vlaneseq
      %v117 = vshrl.u32 %v116, 7
      %v118 = vsub.s32 0, %v117
      %v119 = vrot.slane %v114, %v118
      %v121 = vadd.f32 %v113, %v119
      %122 = vst [vmem:[#allocation2] sm:$0xff] %v121
    $region21: #{cls_fc_forward.1} parent=1 // pred_fallthru
      _
    // Predicated region
    $region22: #{cls_fc_forward.1} parent=1 // pred_check
      _
    $region23: #{cls_fc_forward.1} parent=1 // pred_check_branch
      %124 = sbr.rel (0) target = $region25
    $region24: #{cls_fc_forward.1} parent=1 // pred_region
      %s126 = ssub.s32 128, 128
      %127 = vsyncadd [#allocation3], %s126
      %s129 = sshll.u32 [#allocation2], 4
      %s130 = int_to_ptr.vmem [resolvable:$true] %s129
      %132 = dma.vmem_to_hbm [thread:$0]  %s130, 128, %s3, [#allocation3]
    $region25: #{cls_fc_forward.1} parent=1 // pred_fallthru
      _
    // Predicated region
    $region26: #{cls_fc_forward.1} parent=1 // pred_check
      _
    $region27: #{cls_fc_forward.1} parent=1 // pred_check_branch
      %134 = sbr.rel (0) target = $region29
    $region28: #{cls_fc_forward.1} parent=1 // pred_region
      %135 = dma.done [#allocation3], 128
    $region29: #{cls_fc_forward.1} parent=1 // pred_fallthru
      _
    %136 = vsyncpa [#allocation3], 1

</llo_original>
